<compile_context>
chip_gen: v7x
topology: tpu7x:2x2x1
jax: 0.10.0
libtpu: 0.0.40
codegen_flags: <defaults>
</compile_context>

<pallas_src>
import jax
import jax.numpy as jnp
from jax.experimental import pallas as pl
from jax.experimental.pallas import tpu as pltpu

LANES = 128      # TPU lane width: pad the action dim to this for dense stores
TB_MAX = 1024    # max batch-tile rows; sized for v7x's 64 MiB VMEM with headroom


def _round_up(x, m):
    return (x + m - 1) // m * m


def dqn_kernel(x_ref, w1_ref, b1_ref, w2_ref, b2_ref, w3_ref, b3_ref, o_ref):
    """Fused 3-layer MLP: leaky_relu(fc1) -> leaky_relu(fc2) -> fc3.

    Matmul inputs are bf16 (native MXU rate, halved HBM traffic for streamed x);
    accumulation, bias adds and leaky_relu stay in f32.
    """
    neg_slope = jnp.float32(0.01)  # PyTorch F.leaky_relu default

    x = x_ref[...]                                                   # bf16 (TB, S)
    h1 = jnp.dot(x, w1_ref[...], preferred_element_type=jnp.float32) + b1_ref[...]
    h1 = jnp.where(h1 > 0, h1, neg_slope * h1)                       # f32 (TB, H)

    h2 = jnp.dot(h1.astype(jnp.bfloat16), w2_ref[...],
                 preferred_element_type=jnp.float32) + b2_ref[...]
    h2 = jnp.where(h2 > 0, h2, neg_slope * h2)                       # f32 (TB, 2H)

    h3 = jnp.dot(h2.astype(jnp.bfloat16), w3_ref[...],
                 preferred_element_type=jnp.float32) + b3_ref[...]   # f32 (TB, A_pad)
    o_ref[...] = h3.astype(o_ref.dtype)


def dqn_forward(x, params, *, tb_max=TB_MAX):
    """Fused DQN forward.  x: (B, state_dim) f32.  Returns (B, action_dim) f32."""
    w1 = params["w1"].astype(jnp.bfloat16)
    w2 = params["w2"].astype(jnp.bfloat16)
    b1 = params["b1"].astype(jnp.float32)
    b2 = params["b2"].astype(jnp.float32)

    B, S = x.shape
    H1 = w1.shape[1]
    H2 = w2.shape[1]
    A = params["w3"].shape[1]

    # Lane-dense output: zero-pad fc3 columns to a multiple of 128 lanes.
    A_pad = _round_up(A, LANES)
    w3 = jnp.zeros((H2, A_pad), jnp.bfloat16).at[:, :A].set(
        params["w3"].astype(jnp.bfloat16))
    b3 = jnp.zeros((1, A_pad), jnp.float32).at[:, :A].set(
        params["b3"].astype(jnp.float32))

    # Batch tile: multiple of 8 sublanes, capped for VMEM; pad B up to a tile multiple.
    TB = min(_round_up(tb_max, 8), _round_up(B, 8))
    B_pad = _round_up(B, TB)
    x_p = jnp.zeros((B_pad, S), jnp.bfloat16).at[:B, :].set(x.astype(jnp.bfloat16))

    grid = (B_pad // TB,)

    def batch_spec(cols):
        return pl.BlockSpec((TB, cols), lambda i: (i, 0))

    def const_spec(arr):
        # Same block every step -> stays VMEM resident, no re-DMA per grid step.
        return pl.BlockSpec(arr.shape, lambda i: (0, 0))

    flops = 2 * B_pad * (S * H1 + H1 * H2 + H2 * A_pad)
    bytes_accessed = (x_p.size * 2                      # bf16 x in
                      + B_pad * A_pad * 4               # f32 out
                      + (w1.size + w2.size + w3.size) * 2
                      + (b1.size + b2.size + b3.size) * 4)

    out = pl.pallas_call(
        dqn_kernel,
        out_shape=jax.ShapeDtypeStruct((B_pad, A_pad), jnp.float32),
        grid=grid,
        in_specs=[batch_spec(S),
                  const_spec(w1), const_spec(b1),
                  const_spec(w2), const_spec(b2),
                  const_spec(w3), const_spec(b3)],
        out_specs=pl.BlockSpec((TB, A_pad), lambda i: (i, 0)),
        compiler_params=pltpu.CompilerParams(
            dimension_semantics=("parallel",)),
        cost_estimate=pl.CostEstimate(
            flops=flops, transcendentals=0, bytes_accessed=bytes_accessed),
    )(x_p, w1, b1, w2, b2, w3, b3)

    return out[:B, :A]


def init_params(key, state_dim, action_dim, hidden_dim=64):
    """Deterministic init mimicking nn.Linear's U(-1/sqrt(fan_in), 1/sqrt(fan_in))."""
    ks = jax.random.split(key, 6)

    def linear(kw, kb, fan_in, fan_out):
        bound = 1.0 / jnp.sqrt(jnp.float32(fan_in))
        w = jax.random.uniform(kw, (fan_in, fan_out), jnp.float32, -bound, bound)
        b = jax.random.uniform(kb, (1, fan_out), jnp.float32, -bound, bound)
        return w, b

    w1, b1 = linear(ks[0], ks[1], state_dim, hidden_dim)
    w2, b2 = linear(ks[2], ks[3], hidden_dim, hidden_dim * 2)
    w3, b3 = linear(ks[4], ks[5], hidden_dim * 2, action_dim)
    return {"w1": w1, "b1": b1, "w2": w2, "b2": b2, "w3": w3, "b3": b3}


def dqn_reference_bf16(x, p):
    """Pure-JAX reference matching the kernel's bf16-input / f32-accumulate math."""
    lrelu = lambda v: jnp.where(v > 0, v, 0.01 * v)
    bf = lambda a: a.astype(jnp.bfloat16)
    h1 = lrelu(jnp.dot(bf(x), bf(p["w1"]),
                       preferred_element_type=jnp.float32) + p["b1"])
    h2 = lrelu(jnp.dot(bf(h1), bf(p["w2"]),
                       preferred_element_type=jnp.float32) + p["b2"])
    return jnp.dot(bf(h2), bf(p["w3"]),
                   preferred_element_type=jnp.float32) + p["b3"]


def dqn_reference_f32(x, p):
    """Full-precision reference (looser tolerance vs the bf16 kernel)."""
    lrelu = lambda v: jnp.where(v > 0, v, 0.01 * v)
    h1 = lrelu(x @ p["w1"] + p["b1"])
    h2 = lrelu(h1 @ p["w2"] + p["b2"])
    return h2 @ p["w3"] + p["b3"]


if __name__ == "__main__":
    key = jax.random.PRNGKey(0)
    k_x, k_p = jax.random.split(key)

    batch, state_dim, action_dim, hidden_dim = 64, 4, 2, 64
    x = jax.random.normal(k_x, (batch, state_dim), jnp.float32)
    params = init_params(k_p, state_dim, action_dim, hidden_dim)

    # Single-tile path (TB == batch, grid=(1,)).
    out = dqn_forward(x, params)
    jax.block_until_ready(out)
    assert out.shape == (batch, action_dim)

    ref_bf16 = dqn_reference_bf16(x, params)
    ref_f32 = dqn_reference_f32(x, params)
    assert jnp.allclose(out, ref_bf16, atol=1e-3, rtol=1e-3)
    assert jnp.allclose(out, ref_f32, atol=5e-2, rtol=5e-2)

    # Multi-tile pipelined path (TB=16 -> grid=(4,)), same math.
    out_tiled = dqn_forward(x, params, tb_max=16)
    jax.block_until_ready(out_tiled)
    assert jnp.allclose(out_tiled, ref_bf16, atol=1e-3, rtol=1e-3)

    print("KERNEL_OK")
</pallas_src>

<mosaic_0001>
module attributes {stable_mosaic.version = 11 : i64} {
  func.func @dqn_kernel(%arg0: i32, %arg1: memref<64x4xbf16, #tpu.memory_space<vmem>>, %arg2: memref<4x64xbf16, #tpu.memory_space<vmem>>, %arg3: memref<1x64xf32, #tpu.memory_space<vmem>>, %arg4: memref<64x128xbf16, #tpu.memory_space<vmem>>, %arg5: memref<1x128xf32, #tpu.memory_space<vmem>>, %arg6: memref<128x128xbf16, #tpu.memory_space<vmem>>, %arg7: memref<1x128xf32, #tpu.memory_space<vmem>>, %arg8: memref<64x128xf32, #tpu.memory_space<vmem>>) attributes {dimension_semantics = [#tpu.dimension_semantics<parallel>], iteration_bounds = array<i64: 1>, scalar_prefetch = 0 : i64, scratch_operands = 0 : i64, tpu.core_type = #tpu.core_type<tc>, window_params = [{transform_indices = @transform_0, window_bounds = array<i64: 64, 4>}, {pipeline_mode = #tpu.pipeline_mode<synchronous>, transform_indices = @transform_1, window_bounds = array<i64: 4, 64>}, {pipeline_mode = #tpu.pipeline_mode<synchronous>, transform_indices = @transform_2, window_bounds = array<i64: 1, 64>}, {pipeline_mode = #tpu.pipeline_mode<synchronous>, transform_indices = @transform_3, window_bounds = array<i64: 64, 128>}, {pipeline_mode = #tpu.pipeline_mode<synchronous>, transform_indices = @transform_4, window_bounds = array<i64: 1, 128>}, {pipeline_mode = #tpu.pipeline_mode<synchronous>, transform_indices = @transform_5, window_bounds = array<i64: 128, 128>}, {pipeline_mode = #tpu.pipeline_mode<synchronous>, transform_indices = @transform_6, window_bounds = array<i64: 1, 128>}, {transform_indices = @transform_7, window_bounds = array<i64: 64, 128>}]} {
    %c0 = arith.constant 0 : index
    %c0_0 = arith.constant 0 : index
    %0 = vector.load %arg1[%c0, %c0_0] : memref<64x4xbf16, #tpu.memory_space<vmem>>, vector<64x4xbf16>
    %c0_1 = arith.constant 0 : index
    %c0_2 = arith.constant 0 : index
    %1 = vector.load %arg2[%c0_1, %c0_2] : memref<4x64xbf16, #tpu.memory_space<vmem>>, vector<4x64xbf16>
    %cst = arith.constant dense<0.000000e+00> : vector<64x64xf32>
    %2 = tpu.matmul %0, %1, %cst {dimension_numbers = #tpu.dot_dimension_numbers<[1], [0], [0], [1], [0, 0, 1, 1], [], []>} : vector<64x4xbf16>, vector<4x64xbf16>, vector<64x64xf32> -> vector<64x64xf32>
    %c0_3 = arith.constant 0 : index
    %c0_4 = arith.constant 0 : index
    %3 = vector.load %arg3[%c0_3, %c0_4] : memref<1x64xf32, #tpu.memory_space<vmem>>, vector<1x64xf32>
    %4 = vector.broadcast %3 : vector<1x64xf32> to vector<64x64xf32>
    %5 = arith.addf %2, %4 : vector<64x64xf32>
    %cst_5 = arith.constant 0.000000e+00 : f32
    %6 = vector.broadcast %cst_5 : f32 to vector<64x64xf32>
    %7 = arith.cmpf ogt, %5, %6 : vector<64x64xf32>
    %cst_6 = arith.constant 0.00999999977 : f32
    %8 = vector.broadcast %cst_6 : f32 to vector<64x64xf32>
    %9 = arith.mulf %8, %5 : vector<64x64xf32>
    %10 = arith.select %7, %5, %9 : vector<64x64xi1>, vector<64x64xf32>
    %11 = arith.truncf %10 : vector<64x64xf32> to vector<64x64xbf16>
    %c0_7 = arith.constant 0 : index
    %c0_8 = arith.constant 0 : index
    %12 = vector.load %arg4[%c0_7, %c0_8] : memref<64x128xbf16, #tpu.memory_space<vmem>>, vector<64x128xbf16>
    %cst_9 = arith.constant dense<0.000000e+00> : vector<64x128xf32>
    %13 = tpu.matmul %11, %12, %cst_9 {dimension_numbers = #tpu.dot_dimension_numbers<[1], [0], [0], [1], [0, 0, 1, 1], [], []>} : vector<64x64xbf16>, vector<64x128xbf16>, vector<64x128xf32> -> vector<64x128xf32>
    %c0_10 = arith.constant 0 : index
    %c0_11 = arith.constant 0 : index
    %14 = vector.load %arg5[%c0_10, %c0_11] : memref<1x128xf32, #tpu.memory_space<vmem>>, vector<1x128xf32>
    %15 = vector.broadcast %14 : vector<1x128xf32> to vector<64x128xf32>
    %16 = arith.addf %13, %15 : vector<64x128xf32>
    %cst_12 = arith.constant 0.000000e+00 : f32
    %17 = vector.broadcast %cst_12 : f32 to vector<64x128xf32>
    %18 = arith.cmpf ogt, %16, %17 : vector<64x128xf32>
    %cst_13 = arith.constant 0.00999999977 : f32
    %19 = vector.broadcast %cst_13 : f32 to vector<64x128xf32>
    %20 = arith.mulf %19, %16 : vector<64x128xf32>
    %21 = arith.select %18, %16, %20 : vector<64x128xi1>, vector<64x128xf32>
    %22 = arith.truncf %21 : vector<64x128xf32> to vector<64x128xbf16>
    %c0_14 = arith.constant 0 : index
    %c0_15 = arith.constant 0 : index
    %23 = vector.load %arg6[%c0_14, %c0_15] : memref<128x128xbf16, #tpu.memory_space<vmem>>, vector<128x128xbf16>
    %cst_16 = arith.constant dense<0.000000e+00> : vector<64x128xf32>
    %24 = tpu.matmul %22, %23, %cst_16 {dimension_numbers = #tpu.dot_dimension_numbers<[1], [0], [0], [1], [0, 0, 1, 1], [], []>} : vector<64x128xbf16>, vector<128x128xbf16>, vector<64x128xf32> -> vector<64x128xf32>
    %c0_17 = arith.constant 0 : index
    %c0_18 = arith.constant 0 : index
    %25 = vector.load %arg7[%c0_17, %c0_18] : memref<1x128xf32, #tpu.memory_space<vmem>>, vector<1x128xf32>
    %26 = vector.broadcast %25 : vector<1x128xf32> to vector<64x128xf32>
    %27 = arith.addf %24, %26 : vector<64x128xf32>
    %c0_19 = arith.constant 0 : index
    %c0_20 = arith.constant 0 : index
    %28 = vector.load %arg8[%c0_19, %c0_20] : memref<64x128xf32, #tpu.memory_space<vmem>>, vector<64x128xf32>
    tpu.vector_store %arg8[%c0_19, %c0_20], %27 {strides = array<i32>} : memref<64x128xf32, #tpu.memory_space<vmem>>, vector<64x128xf32>,
    return
  }
  func.func @transform_0(%arg0: i32) -> (i32, i32) {
    %c0_i32 = arith.constant 0 : i32
    %c0_i32_0 = arith.constant 0 : i32
    return %arg0, %c0_i32 : i32, i32
  }
  func.func @transform_1(%arg0: i32) -> (i32, i32) {
    %c0_i32 = arith.constant 0 : i32
    %c0_i32_0 = arith.constant 0 : i32
    %c0_i32_1 = arith.constant 0 : i32
    return %c0_i32, %c0_i32_0 : i32, i32
  }
  func.func @transform_2(%arg0: i32) -> (i32, i32) {
    %c0_i32 = arith.constant 0 : i32
    %c0_i32_0 = arith.constant 0 : i32
    %c0_i32_1 = arith.constant 0 : i32
    return %c0_i32, %c0_i32_0 : i32, i32
  }
  func.func @transform_3(%arg0: i32) -> (i32, i32) {
    %c0_i32 = arith.constant 0 : i32
    %c0_i32_0 = arith.constant 0 : i32
    %c0_i32_1 = arith.constant 0 : i32
    return %c0_i32, %c0_i32_0 : i32, i32
  }
  func.func @transform_4(%arg0: i32) -> (i32, i32) {
    %c0_i32 = arith.constant 0 : i32
    %c0_i32_0 = arith.constant 0 : i32
    %c0_i32_1 = arith.constant 0 : i32
    return %c0_i32, %c0_i32_0 : i32, i32
  }
  func.func @transform_5(%arg0: i32) -> (i32, i32) {
    %c0_i32 = arith.constant 0 : i32
    %c0_i32_0 = arith.constant 0 : i32
    %c0_i32_1 = arith.constant 0 : i32
    return %c0_i32, %c0_i32_0 : i32, i32
  }
  func.func @transform_6(%arg0: i32) -> (i32, i32) {
    %c0_i32 = arith.constant 0 : i32
    %c0_i32_0 = arith.constant 0 : i32
    %c0_i32_1 = arith.constant 0 : i32
    return %c0_i32, %c0_i32_0 : i32, i32
  }
  func.func @transform_7(%arg0: i32) -> (i32, i32) {
    %c0_i32 = arith.constant 0 : i32
    %c0_i32_0 = arith.constant 0 : i32
    return %arg0, %c0_i32 : i32, i32
  }
}

</mosaic_0001>

<llo_original>
// kernel: tpu_custom_call.1
$region0: #{tpu_custom_call.1}
  #allocation0 [shape = 'u32[]', space=smem, size = 0x4, offset = 0x4, fixed_abs, tag = 'smem constant byte address 0x4 - core index']
  #allocation1 [shape = 'u32[144,128]{1,0:T(1,128)}', space=vmem, size = 0x12000, scoped, tag = 'internal scratch']
  %s0 = inlined_call_operand.vmem [shape: bf16[64,4], index: 0, kind: input, shape index: {}]
  %s1 = inlined_call_operand.vmem [shape: bf16[4,64], index: 1, kind: input, shape index: {}]
  %s2 = inlined_call_operand.vmem [shape: f32[1,64], index: 2, kind: input, shape index: {}]
  %s3 = inlined_call_operand.vmem [shape: bf16[64,128], index: 3, kind: input, shape index: {}]
  %s4 = inlined_call_operand.vmem [shape: f32[1,128], index: 4, kind: input, shape index: {}]
  %s5 = inlined_call_operand.hbm [shape: bf16[128,128], index: 5, kind: input, shape index: {}]
  %s6 = inlined_call_operand.vmem [shape: f32[1,128], index: 6, kind: input, shape index: {}]
  %s7 = inlined_call_operand.hbm [shape: f32[64,128], index: 7, kind: output, shape index: {}]
  %s8 = sld [smem:[#allocation0]]
  $region42: #{tpu_custom_call.1} parent=0
    _
  %s10 = ssub.s32 1, %s8
  %s11 = scalar_select 0, %s10, %s8
  $region1: #{tpu_custom_call.1} parent=0
    #allocation2 [shape = 'u8[32768]{0}', space=vmem, size = 0x8000, scoped, tag = 'input window, operand 5, single buffered']
    #allocation3 [shape = 's32[1]{0}', space=sflag, size = 0x4, scoped, tag = 'scoped memory for tpu_custom_call.1']
    #allocation4 [shape = 's32[1]{0}', space=sflag, size = 0x4, scoped, tag = 'scoped memory for tpu_custom_call.1']
    #allocation5 [shape = 'u8[32768]{0}', space=vmem, size = 0x8000, scoped, tag = 'output window, operand 0, single buffered']
    %12 = vsyncpa [#allocation3], 0
    %13 = vsyncpa [#allocation4], 0
    // Predicated region
    $region2: #{tpu_custom_call.1} parent=1 // pred_check
      _
    $region3: #{tpu_custom_call.1} parent=1 // pred_check_branch
      %15 = sbr.rel (0) target = $region5
    $region4: #{tpu_custom_call.1} parent=1 // pred_region
      _
    $region5: #{tpu_custom_call.1} parent=1 // pred_fallthru
      _
    // Predicated region
    $region6: #{tpu_custom_call.1} parent=1 // pred_check
      _
    $region7: #{tpu_custom_call.1} parent=1 // pred_check_branch
      %17 = sbr.rel (0) target = $region9
    $region8: #{tpu_custom_call.1} parent=1 // pred_region
      _
    $region9: #{tpu_custom_call.1} parent=1 // pred_fallthru
      _
    // Predicated region
    $region10: #{tpu_custom_call.1} parent=1 // pred_check
      _
    $region11: #{tpu_custom_call.1} parent=1 // pred_check_branch
      %19 = sbr.rel (0) target = $region13
    $region12: #{tpu_custom_call.1} parent=1 // pred_region
      _
    $region13: #{tpu_custom_call.1} parent=1 // pred_fallthru
      _
    // Predicated region
    $region14: #{tpu_custom_call.1} parent=1 // pred_check
      _
    $region15: #{tpu_custom_call.1} parent=1 // pred_check_branch
      %21 = sbr.rel (0) target = $region17
    $region16: #{tpu_custom_call.1} parent=1 // pred_region
      _
    $region17: #{tpu_custom_call.1} parent=1 // pred_fallthru
      _
    // Predicated region
    $region18: #{tpu_custom_call.1} parent=1 // pred_check
      _
    $region19: #{tpu_custom_call.1} parent=1 // pred_check_branch
      %23 = sbr.rel (0) target = $region21
    $region20: #{tpu_custom_call.1} parent=1 // pred_region
      _
    $region21: #{tpu_custom_call.1} parent=1 // pred_fallthru
      _
    // Predicated region
    $region22: #{tpu_custom_call.1} parent=1 // pred_check
      _
    $region23: #{tpu_custom_call.1} parent=1 // pred_check_branch
      %25 = sbr.rel (0) target = $region25
    $region24: #{tpu_custom_call.1} parent=1 // pred_region
      %s27 = ssub.s32 1024, 1024
      %28 = vsyncadd [#allocation3], %s27
      %s29 = sshll.u32 [#allocation2], 4
      %s30 = int_to_ptr.vmem [resolvable:$true] %s29
      %35 = dma.hbm_to_vmem [thread:$0]  %s5, 1024, %s30, [#allocation3], 64, 64, 4
    $region25: #{tpu_custom_call.1} parent=1 // pred_fallthru
      _
    // Predicated region
    $region26: #{tpu_custom_call.1} parent=1 // pred_check
      _
    $region27: #{tpu_custom_call.1} parent=1 // pred_check_branch
      %37 = sbr.rel (0) target = $region29
    $region28: #{tpu_custom_call.1} parent=1 // pred_region
      _
    $region29: #{tpu_custom_call.1} parent=1 // pred_fallthru
      _
    // Predicated region
    $region30: #{tpu_custom_call.1} parent=1 // pred_check
      _
    $region31: #{tpu_custom_call.1} parent=1 // pred_check_branch
      %39 = sbr.rel (0) target = $region33
    $region32: #{tpu_custom_call.1} parent=1 // pred_region
      %40 = dma.done [#allocation3], 1024
    $region33: #{tpu_custom_call.1} parent=1 // pred_fallthru
      _
    %v42 = vld [vmem:[%s0] sm:$0xf]
    %v43 = vld [vmem:[%s0 + $0x4] sm:$0xf]
    %v44 = vld [vmem:[%s0 + $0x8] sm:$0xf]
    %v45 = vld [vmem:[%s0 + $0xc] sm:$0xf]
    %v46 = vld [vmem:[%s0 + $0x10] sm:$0xf]
    %v47 = vld [vmem:[%s0 + $0x14] sm:$0xf]
    %v48 = vld [vmem:[%s0 + $0x18] sm:$0xf]
    %v49 = vld [vmem:[%s0 + $0x1c] sm:$0xf]
    %v50 = vld [vmem:[%s1] sm:$0x3]
    %v51 = vld [vmem:[%s2] sm:$0x1]
    %v53 = vlaneseq
    %v54 = vshrl.u32 %v53, 7
    %v55 = vsub.s32 0, %v54
    %v56 = vrot.slane %v51, %v55
    %v66 = vunpack.c.l.b16 %v42
    %v67 = vunpack.c.l.b16 %v43
    %v68 = vunpack.c.l.b16 %v44
    %v69 = vunpack.c.l.b16 %v45
    %v70 = vunpack.c.l.b16 %v46
    %v71 = vunpack.c.l.b16 %v47
    %v72 = vunpack.c.l.b16 %v48
    %v73 = vunpack.c.l.b16 %v49
    %v74 = vpack.c.b16 %v67, %v66
    %v75 = vpack.c.b16 %v69, %v68
    %v76 = vpack.c.b16 %v71, %v70
    %v77 = vpack.c.b16 %v73, %v72
    %vm78 = vcmask 31744
    %v80 = vsel %vm78, %v74, 0
    %v83 = vsel %vm78, %v75, 0
    %v86 = vsel %vm78, %v76, 0
    %v89 = vsel %vm78, %v77, 0
    %vm91 = vcmask 1041408
    %v93 = vsel %vm91, %v50, 0
    %95 = vmatprep.subr.bf16.mxu0 0
    %96 = vmatpush1.bf16.msra.mxu0 %v93
    %97 = vmatprep.subr.bf16.mxu0 0
    %98 = vmatpush1.bf16.msra.mxu0 0
    %99 = vmatprep.subr.bf16.mxu0 0
    %100 = vmatpush1.bf16.msra.mxu0 0
    %101 = vmatprep.subr.bf16.mxu0 0
    %102 = vmatpush1.bf16.msra.mxu0 0
    %103 = vmatprep.subr.bf16.mxu0 0
    %104 = vmatpush1.bf16.msra.mxu0 0
    %105 = vmatprep.subr.bf16.mxu0 0
    %106 = vmatpush1.bf16.msra.mxu0 0
    %107 = vmatprep.subr.bf16.mxu0 0
    %108 = vmatpush1.bf16.msra.mxu0 0
    %109 = vmatprep.subr.bf16.mxu0 0
    %110 = vmatpush1.bf16.msra.mxu0 0
    %111 = vmatprep.subr.bf16.mxu0 0
    %112 = vmatpush1.bf16.msra.mxu0 0
    %113 = vmatprep.subr.bf16.mxu0 0
    %114 = vmatpush1.bf16.msra.mxu0 0
    %115 = vmatprep.subr.bf16.mxu0 0
    %116 = vmatpush1.bf16.msra.mxu0 0
    %117 = vmatprep.subr.bf16.mxu0 0
    %118 = vmatpush1.bf16.msra.mxu0 0
    %119 = vmatprep.subr.bf16.mxu0 0
    %120 = vmatpush1.bf16.msra.mxu0 0
    %121 = vmatprep.subr.bf16.mxu0 0
    %122 = vmatpush1.bf16.msra.mxu0 0
    %123 = vmatprep.subr.bf16.mxu0 0
    %124 = vmatpush1.bf16.msra.mxu0 0
    %125 = vmatprep.subr.bf16.mxu0 0
    %126 = vmatpush1.bf16.msra.mxu0 0
    %127 = vmatprep.mubr.bf16.mxu0 0
    %128 = vmatmul.mubr.bf16.gmra.mrb[0].mxu0 %v80
    %v129 = vpop.f32.mrb[0].mxu0
    %v130 = vadd.f32 %v56, %v129
    %v131 = vpop.f32.mrb[0].mxu0
    %v132 = vpop.f32.mrb[0].mxu0
    %v133 = vadd.f32 %v56, %v132
    %v134 = vpop.f32.mrb[0].mxu0
    %135 = vmatprep.mubr.bf16.mxu0 0
    %136 = vmatmul.mubr.bf16.gmra.mrb[0].mxu0 %v83
    %v137 = vpop.f32.mrb[0].mxu0
    %v138 = vadd.f32 %v56, %v137
    %v139 = vpop.f32.mrb[0].mxu0
    %v140 = vpop.f32.mrb[0].mxu0
    %v141 = vadd.f32 %v56, %v140
    %v142 = vpop.f32.mrb[0].mxu0
    %143 = vmatprep.mubr.bf16.mxu0 0
    %144 = vmatmul.mubr.bf16.gmra.mrb[0].mxu0 %v86
    %v145 = vpop.f32.mrb[0].mxu0
    %v146 = vadd.f32 %v56, %v145
    %v147 = vpop.f32.mrb[0].mxu0
    %v148 = vpop.f32.mrb[0].mxu0
    %v149 = vadd.f32 %v56, %v148
    %v150 = vpop.f32.mrb[0].mxu0
    %151 = vmatprep.mubr.bf16.mxu0 0
    %152 = vmatmul.mubr.bf16.gmra.mrb[0].mxu0 %v89
    %v153 = vpop.f32.mrb[0].mxu0
    %v154 = vadd.f32 %v56, %v153
    %v155 = vpop.f32.mrb[0].mxu0
    %v156 = vpop.f32.mrb[0].mxu0
    %v157 = vadd.f32 %v56, %v156
    %v158 = vpop.f32.mrb[0].mxu0
    %159 = vdwg.mxu0
    %vm160 = vcmp.gt.f32.partialorder %v130, 0.0
    %vm161 = vcmp.gt.f32.partialorder %v133, 0.0
    %vm162 = vcmp.gt.f32.partialorder %v138, 0.0
    %vm163 = vcmp.gt.f32.partialorder %v141, 0.0
    %vm164 = vcmp.gt.f32.partialorder %v146, 0.0
    %vm165 = vcmp.gt.f32.partialorder %v149, 0.0
    %vm166 = vcmp.gt.f32.partialorder %v154, 0.0
    %vm167 = vcmp.gt.f32.partialorder %v157, 0.0
    %v168 = vmul.f32 %v130, 0.01
    %v169 = vmul.f32 %v133, 0.01
    %v170 = vmul.f32 %v138, 0.01
    %v171 = vmul.f32 %v141, 0.01
    %v172 = vmul.f32 %v146, 0.01
    %v173 = vmul.f32 %v149, 0.01
    %v174 = vmul.f32 %v154, 0.01
    %v175 = vmul.f32 %v157, 0.01
    %v176 = vsel %vm160, %v130, %v168
    %v177 = vsel %vm161, %v133, %v169
    %v178 = vsel %vm162, %v138, %v170
    %v179 = vsel %vm163, %v141, %v171
    %v180 = vsel %vm164, %v146, %v172
    %v181 = vsel %vm165, %v149, %v173
    %v182 = vsel %vm166, %v154, %v174
    %v183 = vsel %vm167, %v157, %v175
    %v184 = vpack.c.bf16 %v177, %v176
    %v185 = vpack.c.bf16 %v179, %v178
    %v186 = vpack.c.bf16 %v181, %v180
    %v187 = vpack.c.bf16 %v183, %v182
    %v188 = vld [vmem:[%s3] sm:$0xf]
    %v189 = vld [vmem:[%s3 + $0x4] sm:$0xf]
    %v190 = vld [vmem:[%s3 + $0x8] sm:$0xf]
    %v191 = vld [vmem:[%s3 + $0xc] sm:$0xf]
    %v192 = vld [vmem:[%s3 + $0x10] sm:$0xf]
    %v193 = vld [vmem:[%s3 + $0x14] sm:$0xf]
    %v194 = vld [vmem:[%s3 + $0x18] sm:$0xf]
    %v195 = vld [vmem:[%s3 + $0x1c] sm:$0xf]
    %v196 = vld [vmem:[%s4] sm:$0x1]
    %v198 = vlaneseq
    %v199 = vshrl.u32 %v198, 7
    %v200 = vsub.s32 0, %v199
    %v201 = vrot.slane %v196, %v200
    %v211 = vunpack.c.l.b16 %v188
    %v212 = vunpack.c.l.b16 %v189
    %v213 = vunpack.c.l.b16 %v190
    %v214 = vunpack.c.l.b16 %v191
    %v215 = vunpack.c.l.b16 %v192
    %v216 = vunpack.c.l.b16 %v193
    %v217 = vunpack.c.l.b16 %v194
    %v218 = vunpack.c.l.b16 %v195
    %v219 = vpack.c.b16 %v212, %v211
    %v220 = vpack.c.b16 %v214, %v213
    %v221 = vpack.c.b16 %v216, %v215
    %v222 = vpack.c.b16 %v218, %v217
    %vm227 = vcmask 523264
    %v229 = vsel %vm227, %v184, 0
    %v232 = vsel %vm227, %v185, 0
    %v235 = vsel %vm227, %v186, 0
    %v238 = vsel %vm227, %v187, 0
    %240 = vmatprep.subr.bf16.mxu0 0
    %241 = vmatpush1.bf16.msra.mxu0 %v219
    %242 = vmatprep.subr.bf16.mxu0 0
    %243 = vmatpush1.bf16.msra.mxu0 %v220
    %244 = vmatprep.subr.bf16.mxu0 0
    %245 = vmatpush1.bf16.msra.mxu0 %v221
    %246 = vmatprep.subr.bf16.mxu0 0
    %247 = vmatpush1.bf16.msra.mxu0 %v222
    %248 = vmatprep.subr.bf16.mxu0 0
    %249 = vmatpush1.bf16.msra.mxu0 0
    %250 = vmatprep.subr.bf16.mxu0 0
    %251 = vmatpush1.bf16.msra.mxu0 0
    %252 = vmatprep.subr.bf16.mxu0 0
    %253 = vmatpush1.bf16.msra.mxu0 0
    %254 = vmatprep.subr.bf16.mxu0 0
    %255 = vmatpush1.bf16.msra.mxu0 0
    %256 = vmatprep.subr.bf16.mxu0 0
    %257 = vmatpush1.bf16.msra.mxu0 0
    %258 = vmatprep.subr.bf16.mxu0 0
    %259 = vmatpush1.bf16.msra.mxu0 0
    %260 = vmatprep.subr.bf16.mxu0 0
    %261 = vmatpush1.bf16.msra.mxu0 0
    %262 = vmatprep.subr.bf16.mxu0 0
    %263 = vmatpush1.bf16.msra.mxu0 0
    %264 = vmatprep.subr.bf16.mxu0 0
    %265 = vmatpush1.bf16.msra.mxu0 0
    %266 = vmatprep.subr.bf16.mxu0 0
    %267 = vmatpush1.bf16.msra.mxu0 0
    %268 = vmatprep.subr.bf16.mxu0 0
    %269 = vmatpush1.bf16.msra.mxu0 0
    %270 = vmatprep.subr.bf16.mxu0 0
    %271 = vmatpush1.bf16.msra.mxu0 0
    %272 = vmatprep.mubr.bf16.mxu0 0
    %273 = vmatmul.mubr.bf16.gmra.mrb[0].mxu0 %v229
    %v274 = vpop.f32.mrb[0].mxu0
    %v275 = vadd.f32 %v201, %v274
    %v276 = vpop.f32.mrb[0].mxu0
    %v277 = vpop.f32.mrb[0].mxu0
    %v278 = vadd.f32 %v201, %v277
    %v279 = vpop.f32.mrb[0].mxu0
    %280 = vmatprep.mubr.bf16.mxu0 0
    %281 = vmatmul.mubr.bf16.gmra.mrb[0].mxu0 %v232
    %v282 = vpop.f32.mrb[0].mxu0
    %v283 = vadd.f32 %v201, %v282
    %v284 = vpop.f32.mrb[0].mxu0
    %v285 = vpop.f32.mrb[0].mxu0
    %v286 = vadd.f32 %v201, %v285
    %v287 = vpop.f32.mrb[0].mxu0
    %288 = vmatprep.mubr.bf16.mxu0 0
    %289 = vmatmul.mubr.bf16.gmra.mrb[0].mxu0 %v235
    %v290 = vpop.f32.mrb[0].mxu0
    %v291 = vadd.f32 %v201, %v290
    %v292 = vpop.f32.mrb[0].mxu0
    %v293 = vpop.f32.mrb[0].mxu0
    %v294 = vadd.f32 %v201, %v293
    %v295 = vpop.f32.mrb[0].mxu0
    %296 = vmatprep.mubr.bf16.mxu0 0
    %297 = vmatmul.mubr.bf16.gmra.mrb[0].mxu0 %v238
    %v298 = vpop.f32.mrb[0].mxu0
    %v299 = vadd.f32 %v201, %v298
    %v300 = vpop.f32.mrb[0].mxu0
    %v301 = vpop.f32.mrb[0].mxu0
    %v302 = vadd.f32 %v201, %v301
    %v303 = vpop.f32.mrb[0].mxu0
    %304 = vdwg.mxu0
    %vm305 = vcmp.gt.f32.partialorder %v275, 0.0
    %vm306 = vcmp.gt.f32.partialorder %v278, 0.0
    %vm307 = vcmp.gt.f32.partialorder %v283, 0.0
    %vm308 = vcmp.gt.f32.partialorder %v286, 0.0
    %vm309 = vcmp.gt.f32.partialorder %v291, 0.0
    %vm310 = vcmp.gt.f32.partialorder %v294, 0.0
    %vm311 = vcmp.gt.f32.partialorder %v299, 0.0
    %vm312 = vcmp.gt.f32.partialorder %v302, 0.0
    %v313 = vmul.f32 %v275, 0.01
    %v314 = vmul.f32 %v278, 0.01
    %v315 = vmul.f32 %v283, 0.01
    %v316 = vmul.f32 %v286, 0.01
    %v317 = vmul.f32 %v291, 0.01
    %v318 = vmul.f32 %v294, 0.01
    %v319 = vmul.f32 %v299, 0.01
    %v320 = vmul.f32 %v302, 0.01
    %v321 = vsel %vm305, %v275, %v313
    %v322 = vsel %vm306, %v278, %v314
    %v323 = vsel %vm307, %v283, %v315
    %v324 = vsel %vm308, %v286, %v316
    %v325 = vsel %vm309, %v291, %v317
    %v326 = vsel %vm310, %v294, %v318
    %v327 = vsel %vm311, %v299, %v319
    %v328 = vsel %vm312, %v302, %v320
    %v329 = vpack.c.bf16 %v322, %v321
    %v330 = vpack.c.bf16 %v324, %v323
    %v331 = vpack.c.bf16 %v326, %v325
    %v332 = vpack.c.bf16 %v328, %v327
    %v333 = vld [vmem:[#allocation2] sm:$0xf]
    %v334 = vld [vmem:[#allocation2 + $0x4] sm:$0xf]
    %v335 = vld [vmem:[#allocation2 + $0x8] sm:$0xf]
    %v336 = vld [vmem:[#allocation2 + $0xc] sm:$0xf]
    %v337 = vld [vmem:[#allocation2 + $0x10] sm:$0xf]
    %v338 = vld [vmem:[#allocation2 + $0x14] sm:$0xf]
    %v339 = vld [vmem:[#allocation2 + $0x18] sm:$0xf]
    %v340 = vld [vmem:[#allocation2 + $0x1c] sm:$0xf]
    %v341 = vld [vmem:[#allocation2 + $0x20] sm:$0xf]
    %v342 = vld [vmem:[#allocation2 + $0x24] sm:$0xf]
    %v343 = vld [vmem:[#allocation2 + $0x28] sm:$0xf]
    %v344 = vld [vmem:[#allocation2 + $0x2c] sm:$0xf]
    %v345 = vld [vmem:[#allocation2 + $0x30] sm:$0xf]
    %v346 = vld [vmem:[#allocation2 + $0x34] sm:$0xf]
    %v347 = vld [vmem:[#allocation2 + $0x38] sm:$0xf]
    %v348 = vld [vmem:[#allocation2 + $0x3c] sm:$0xf]
    %v349 = vld [vmem:[%s6] sm:$0x1]
    %v351 = vlaneseq
    %v352 = vshrl.u32 %v351, 7
    %v353 = vsub.s32 0, %v352
    %v354 = vrot.slane %v349, %v353
    %v372 = vunpack.c.l.b16 %v333
    %v373 = vunpack.c.l.b16 %v334
    %v374 = vunpack.c.l.b16 %v335
    %v375 = vunpack.c.l.b16 %v336
    %v376 = vunpack.c.l.b16 %v337
    %v377 = vunpack.c.l.b16 %v338
    %v378 = vunpack.c.l.b16 %v339
    %v379 = vunpack.c.l.b16 %v340
    %v380 = vunpack.c.l.b16 %v341
    %v381 = vunpack.c.l.b16 %v342
    %v382 = vunpack.c.l.b16 %v343
    %v383 = vunpack.c.l.b16 %v344
    %v384 = vunpack.c.l.b16 %v345
    %v385 = vunpack.c.l.b16 %v346
    %v386 = vunpack.c.l.b16 %v347
    %v387 = vunpack.c.l.b16 %v348
    %v388 = vpack.c.b16 %v373, %v372
    %v389 = vpack.c.b16 %v375, %v374
    %v390 = vpack.c.b16 %v377, %v376
    %v391 = vpack.c.b16 %v379, %v378
    %v392 = vpack.c.b16 %v381, %v380
    %v393 = vpack.c.b16 %v383, %v382
    %v394 = vpack.c.b16 %v385, %v384
    %v395 = vpack.c.b16 %v387, %v386
    %404 = vmatprep.subr.bf16.mxu0 0
    %405 = vmatpush1.bf16.msra.mxu0 %v388
    %406 = vmatprep.subr.bf16.mxu0 0
    %407 = vmatpush1.bf16.msra.mxu0 %v389
    %408 = vmatprep.subr.bf16.mxu0 0
    %409 = vmatpush1.bf16.msra.mxu0 %v390
    %410 = vmatprep.subr.bf16.mxu0 0
    %411 = vmatpush1.bf16.msra.mxu0 %v391
    %412 = vmatprep.subr.bf16.mxu0 0
    %413 = vmatpush1.bf16.msra.mxu0 %v392
    %414 = vmatprep.subr.bf16.mxu0 0
    %415 = vmatpush1.bf16.msra.mxu0 %v393
    %416 = vmatprep.subr.bf16.mxu0 0
    %417 = vmatpush1.bf16.msra.mxu0 %v394
    %418 = vmatprep.subr.bf16.mxu0 0
    %419 = vmatpush1.bf16.msra.mxu0 %v395
    %420 = vmatprep.subr.bf16.mxu0 0
    %421 = vmatpush1.bf16.msra.mxu0 0
    %422 = vmatprep.subr.bf16.mxu0 0
    %423 = vmatpush1.bf16.msra.mxu0 0
    %424 = vmatprep.subr.bf16.mxu0 0
    %425 = vmatpush1.bf16.msra.mxu0 0
    %426 = vmatprep.subr.bf16.mxu0 0
    %427 = vmatpush1.bf16.msra.mxu0 0
    %428 = vmatprep.subr.bf16.mxu0 0
    %429 = vmatpush1.bf16.msra.mxu0 0
    %430 = vmatprep.subr.bf16.mxu0 0
    %431 = vmatpush1.bf16.msra.mxu0 0
    %432 = vmatprep.subr.bf16.mxu0 0
    %433 = vmatpush1.bf16.msra.mxu0 0
    %434 = vmatprep.subr.bf16.mxu0 0
    %435 = vmatpush1.bf16.msra.mxu0 0
    %436 = vmatprep.mubr.bf16.mxu0 0
    %437 = vmatmul.mubr.bf16.gmra.mrb[0].mxu0 %v329
    %v438 = vpop.f32.mrb[0].mxu0
    %v439 = vadd.f32 %v354, %v438
    %v440 = vpop.f32.mrb[0].mxu0
    %v441 = vpop.f32.mrb[0].mxu0
    %v442 = vadd.f32 %v354, %v441
    %v443 = vpop.f32.mrb[0].mxu0
    %444 = vmatprep.mubr.bf16.mxu0 0
    %445 = vmatmul.mubr.bf16.gmra.mrb[0].mxu0 %v330
    %v446 = vpop.f32.mrb[0].mxu0
    %v447 = vadd.f32 %v354, %v446
    %v448 = vpop.f32.mrb[0].mxu0
    %v449 = vpop.f32.mrb[0].mxu0
    %v450 = vadd.f32 %v354, %v449
    %v451 = vpop.f32.mrb[0].mxu0
    %452 = vmatprep.mubr.bf16.mxu0 0
    %453 = vmatmul.mubr.bf16.gmra.mrb[0].mxu0 %v331
    %v454 = vpop.f32.mrb[0].mxu0
    %v455 = vadd.f32 %v354, %v454
    %v456 = vpop.f32.mrb[0].mxu0
    %v457 = vpop.f32.mrb[0].mxu0
    %v458 = vadd.f32 %v354, %v457
    %v459 = vpop.f32.mrb[0].mxu0
    %460 = vmatprep.mubr.bf16.mxu0 0
    %461 = vmatmul.mubr.bf16.gmra.mrb[0].mxu0 %v332
    %v462 = vpop.f32.mrb[0].mxu0
    %v463 = vadd.f32 %v354, %v462
    %v464 = vpop.f32.mrb[0].mxu0
    %v465 = vpop.f32.mrb[0].mxu0
    %v466 = vadd.f32 %v354, %v465
    %v467 = vpop.f32.mrb[0].mxu0
    %468 = vdwg.mxu0
    %469 = vst [vmem:[#allocation5] sm:$0xff] %v439
    %470 = vst [vmem:[#allocation5 + $0x8] sm:$0xff] %v442
    %471 = vst [vmem:[#allocation5 + $0x10] sm:$0xff] %v447
    %472 = vst [vmem:[#allocation5 + $0x18] sm:$0xff] %v450
    %473 = vst [vmem:[#allocation5 + $0x20] sm:$0xff] %v455
    %474 = vst [vmem:[#allocation5 + $0x28] sm:$0xff] %v458
    %475 = vst [vmem:[#allocation5 + $0x30] sm:$0xff] %v463
    %476 = vst [vmem:[#allocation5 + $0x38] sm:$0xff] %v466
    // Predicated region
    $region34: #{tpu_custom_call.1} parent=1 // pred_check
      _
    $region35: #{tpu_custom_call.1} parent=1 // pred_check_branch
      %478 = sbr.rel (0) target = $region37
    $region36: #{tpu_custom_call.1} parent=1 // pred_region
      %s480 = ssub.s32 1024, 1024
      %481 = vsyncadd [#allocation4], %s480
      %s482 = sshll.u32 [#allocation5], 4
      %s483 = int_to_ptr.vmem [resolvable:$true] %s482
      %488 = dma.vmem_to_hbm [thread:$0]  %s483, 1024, %s7, [#allocation4], 128, 128, 8
    $region37: #{tpu_custom_call.1} parent=1 // pred_fallthru
      _
    // Predicated region
    $region38: #{tpu_custom_call.1} parent=1 // pred_check
      _
    $region39: #{tpu_custom_call.1} parent=1 // pred_check_branch
      %490 = sbr.rel (0) target = $region41
    $region40: #{tpu_custom_call.1} parent=1 // pred_region
      %491 = dma.done [#allocation4], 1024
    $region41: #{tpu_custom_call.1} parent=1 // pred_fallthru
      _
    %492 = vsyncpa [#allocation3], 1
    %493 = vsyncpa [#allocation4], 1

</llo_original>
